<compile_context>
chip_gen: v7x
topology: tpu7x:2x2x1
jax: 0.10.0
libtpu: 0.0.40
codegen_flags: <defaults>
</compile_context>

<pallas_src>
import functools

import numpy as np
import jax
import jax.numpy as jnp
from jax import lax
from jax.experimental import pallas as pl
from jax.experimental.pallas import tpu as pltpu


def _round_up(x, m):
    return ((x + m - 1) // m) * m


def _cdiv(a, b):
    return -(-a // b)


# ----------------------------------------------------------------------------
# Constant operand construction (plain numpy "glue": fused expansion matrices)
# ----------------------------------------------------------------------------
def _gellmann_matrices(d):
    """Standard generalized Gell-Mann matrices, order: sym(i<j), antisym(i<j), diag."""
    mats = []
    for i in range(d):
        for j in range(i + 1, d):
            m = np.zeros((d, d), dtype=np.complex128)
            m[i, j] = 1.0
            m[j, i] = 1.0
            mats.append(m)
    for i in range(d):
        for j in range(i + 1, d):
            m = np.zeros((d, d), dtype=np.complex128)
            m[i, j] = -1j
            m[j, i] = 1j
            mats.append(m)
    for k in range(1, d):
        m = np.zeros((d, d), dtype=np.complex128)
        coef = np.sqrt(2.0 / (k * (k + 1)))
        for i in range(k):
            m[i, i] = coef
        m[k, k] = -k * coef
        mats.append(m)
    return np.stack(mats)  # (d^2-1, d, d)


def build_constant_operands(dimA, dimB):
    """Pre-transposed fused expansion / projection operands.

    Returns (ET, QT, GrT, GiT), gm where
      ET  (4d, 2*(dimA+dimB)) : packed states -> [a_r; a_i; b_r; b_i]   (kron broadcast)
      QT  (2*d*d, d)          : psi -> [psi_i ; psi_j] over flattened (i,j) = i*d+j
      GrT (pad8(d*d-1), d*d)  : Re(rho) -> Gell-Mann coeff contribution
      GiT (pad8(d*d-1), d*d)  : Im(rho) -> Gell-Mann coeff contribution (sign folded in)
    """
    d = dimA * dimB
    dd = d * d
    nglm = dd - 1
    width = 2 * (dimA + dimB)

    # packed input rows: [s0r(dimA) | s0i(dimA) | s1r(dimB) | s1i(dimB)]
    ET = np.zeros((4 * d, width), np.float32)
    for a in range(dimA):
        for b in range(dimB):
            k = a * dimB + b
            ET[0 * d + k, a] = 1.0                     # a_r <- s0r[a]
            ET[1 * d + k, dimA + a] = 1.0              # a_i <- s0i[a]
            ET[2 * d + k, 2 * dimA + b] = 1.0          # b_r <- s1r[b]
            ET[3 * d + k, 2 * dimA + dimB + b] = 1.0   # b_i <- s1i[b]

    # QT @ p -> [p_i ; p_j] for flattened k = i*d + j (shared by real & imag parts).
    QT = np.zeros((2 * dd, d), np.float32)
    for i in range(d):
        for j in range(d):
            k = i * d + j
            QT[0 * dd + k, i] = 1.0
            QT[1 * dd + k, j] = 1.0

    # coefficient c_k = Tr(rho M_k)/2
    #   = sum_ij [ Re(rho_ij)*Re(M_k[j,i]) - Im(rho_ij)*Im(M_k[j,i]) ] / 2
    gm = _gellmann_matrices(d)
    nglm_pad = _round_up(nglm, 8)            # sublane-padded (was 128-lane-padded in v2)
    GrT = np.zeros((nglm_pad, dd), np.float32)
    GiT = np.zeros((nglm_pad, dd), np.float32)
    for k in range(nglm):
        for i in range(d):
            for j in range(d):
                GrT[k, i * d + j] = 0.5 * gm[k, j, i].real
                GiT[k, i * d + j] = -0.5 * gm[k, j, i].imag

    consts = tuple(jnp.asarray(m) for m in (ET, QT, GrT, GiT))
    return consts, gm


# ----------------------------------------------------------------------------
# Pallas kernel: packed states -> normalized rho -> Gell-Mann coefficients
# (everything laid out as (feature, state): states are lane-dense)
# ----------------------------------------------------------------------------
def cha_gellmann_kernel(x_ref, et_ref, qt_ref, grt_ref, git_ref, out_ref, *, dimA, dimB):
    f32 = jnp.float32
    d = dimA * dimB
    dd = d * d

    x = x_ref[...]  # (2*(dimA+dimB), tn): rows [s0r | s0i | s1r | s1i], states on lanes

    # 1/(||s0||*||s1||) straight from the packed input: EUP rsqrt, lane-dense.
    n0 = jnp.sum(x[: 2 * dimA, :] * x[: 2 * dimA, :], axis=0, keepdims=True)
    n1 = jnp.sum(x[2 * dimA:, :] * x[2 * dimA:, :], axis=0, keepdims=True)
    inv_norm = lax.rsqrt(n0 * n1)                                   # (1, tn)

    # Kron broadcast: one small-K MXU dot -> [a_r; a_i; b_r; b_i]   (4d, tn)
    ab = jnp.dot(et_ref[...], x, preferred_element_type=f32)
    a_r = ab[0 * d:1 * d, :]
    a_i = ab[1 * d:2 * d, :]
    b_r = ab[2 * d:3 * d, :]
    b_i = ab[3 * d:4 * d, :]

    # normalized psi = (s0 (x) s1) / (||s0||*||s1||); flattened index a*dimB + b
    pr = (a_r * b_r - a_i * b_i) * inv_norm                         # (d, tn)
    pi = (a_r * b_i + a_i * b_r) * inv_norm                         # (d, tn)

    # rho_ij = psi_i * conj(psi_j), flattened to (dd, tn) at i*d + j.
    tr = jnp.dot(qt_ref[...], pr, preferred_element_type=f32)       # (2dd, tn) = [pr_i; pr_j]
    ti = jnp.dot(qt_ref[...], pi, preferred_element_type=f32)       # (2dd, tn) = [pi_i; pi_j]
    rho_r = tr[:dd, :] * tr[dd:, :] + ti[:dd, :] * ti[dd:, :]
    rho_i = ti[:dd, :] * tr[dd:, :] - tr[:dd, :] * ti[dd:, :]

    # Gell-Mann projection: two split dots (no concat), sublane-padded, lane-dense store.
    out_ref[...] = (jnp.dot(grt_ref[...], rho_r, preferred_element_type=f32)
                    + jnp.dot(git_ref[...], rho_i, preferred_element_type=f32))


# ----------------------------------------------------------------------------
# Wrappers
# ----------------------------------------------------------------------------
def _choose_tile(num_state, dimA, dimB, tile_n_max=2048):
    d = dimA * dimB
    dd = d * d
    width = 2 * (dimA + dimB)
    nglm_pad = _round_up(dd - 1, 8)
    # rough per-state f32 footprint: double-buffered in/out blocks + live intermediates
    bytes_per_state = 4 * (3 * width + 6 * d + 6 * dd + 3 * nglm_pad)
    tn_cap = max(128, ((24 << 20) // max(bytes_per_state, 1)) // 128 * 128)  # ~24 MiB cap (v7x-safe)
    tn_cap = min(tn_cap, _round_up(tile_n_max, 128))
    n128 = _round_up(max(num_state, 1), 128)
    n_tiles = _cdiv(n128, tn_cap)
    if n_tiles < 2 and n128 >= 256:
        n_tiles = 2                       # v7x: give both TensorCores a grid step
    tn = _round_up(_cdiv(n128, n_tiles), 128)
    n_pad = tn * _cdiv(n128, tn)
    return tn, n_pad


def cha_states_to_gellmann(s0r, s0i, s1r, s1i, consts, dimA, dimB, *, tile_n=2048):
    et, qt, grt, git = consts
    num_state = s0r.shape[0]
    d = dimA * dimB
    nglm = d * d - 1
    nglm_pad = grt.shape[0]
    width = 2 * (dimA + dimB)

    tn, n_pad = _choose_tile(num_state, dimA, dimB, tile_n)

    # One packed input, transposed so num_state sits on the lane axis (single DMA).
    packed = jnp.concatenate([s0r, s0i, s1r, s1i], axis=1).astype(jnp.float32).T  # (width, N)
    if n_pad != num_state:
        # pad with 1.0 so padded states stay finite (sliced off below anyway)
        packed = jnp.pad(packed, ((0, 0), (0, n_pad - num_state)), constant_values=1.0)

    kernel = functools.partial(cha_gellmann_kernel, dimA=dimA, dimB=dimB)
    out_pad = pl.pallas_call(
        kernel,
        out_shape=jax.ShapeDtypeStruct((nglm_pad, n_pad), jnp.float32),
        grid_spec=pltpu.PrefetchScalarGridSpec(
            num_scalar_prefetch=0,
            grid=(n_pad // tn,),
            in_specs=[
                pl.BlockSpec((width, tn), lambda i: (0, i)),
                # constants: full block, constant index_map -> stay VMEM-resident
                pl.BlockSpec(et.shape, lambda i: (0, 0)),
                pl.BlockSpec(qt.shape, lambda i: (0, 0)),
                pl.BlockSpec(grt.shape, lambda i: (0, 0)),
                pl.BlockSpec(git.shape, lambda i: (0, 0)),
            ],
            out_specs=pl.BlockSpec((nglm_pad, tn), lambda i: (0, i)),
        ),
        compiler_params=pltpu.CompilerParams(
            dimension_semantics=("parallel",),
            # 32 MiB fits every generation's scoped VMEM (v5e default is only 16 MiB,
            # hence explicit); the tile chooser keeps the working set under ~24 MiB.
            # For very large d on v6e, raise this instead of shrinking the tile.
            vmem_limit_bytes=32 * 1024 * 1024,
        ),
    )(packed, et, qt, grt, git)

    return out_pad[:nglm, :num_state].T  # (num_state, d^2-1)


def autodiff_cha_alpha_forward(params, dm_target, consts, dimA, dimB):
    """Pallas version of AutodiffCHAAlpha.forward() up to the cvxpylayer call."""
    s0r, s0i, s1r, s1i = params
    rho_gm = cha_states_to_gellmann(s0r, s0i, s1r, s1i, consts, dimA, dimB)

    # Target-dm projection: one (d^2-1, d^2) @ (d^2,) contraction -- done in plain
    # XLA (a dedicated pallas_call would cost far more than the compute it does).
    d = dimA * dimB
    _, _, grt, git = consts
    nglm = d * d - 1
    dm_r = jnp.real(dm_target).astype(jnp.float32).reshape(d * d)
    dm_i = jnp.imag(dm_target).astype(jnp.float32).reshape(d * d)
    target_gm = grt[:nglm] @ dm_r + git[:nglm] @ dm_i  # (d^2-1,)

    # TODO(synk): the cvxpylayers LP (maximize alpha s.t. alpha*target_gm ==
    # rho_gm.T @ lambda, lambda >= 0, sum(lambda) == 1) is an iterative conic
    # solve with no Pallas equivalent; return its two inputs instead of loss=-alpha.
    return rho_gm, target_gm


# ----------------------------------------------------------------------------
# Main: deterministic small-shape run + pure-numpy reference check
# ----------------------------------------------------------------------------
if __name__ == "__main__":
    num_state, dimA, dimB = 8, 2, 2
    d = dimA * dimB
    consts, gm_np = build_constant_operands(dimA, dimB)

    key = jax.random.PRNGKey(0)
    k0, k1, k2, k3, k4, k5 = jax.random.split(key, 6)
    # Haar states ~ normalized complex Gaussians; forward() normalizes, so
    # Gaussian init is equivalent.
    s0r = jax.random.normal(k0, (num_state, dimA), dtype=jnp.float32)
    s0i = jax.random.normal(k1, (num_state, dimA), dtype=jnp.float32)
    s1r = jax.random.normal(k2, (num_state, dimB), dtype=jnp.float32)
    s1i = jax.random.normal(k3, (num_state, dimB), dtype=jnp.float32)

    # deterministic target density matrix: dm = A A^dag / Tr(A A^dag)
    ar = np.asarray(jax.random.normal(k4, (d, d), dtype=jnp.float32), dtype=np.float64)
    ai = np.asarray(jax.random.normal(k5, (d, d), dtype=jnp.float32), dtype=np.float64)
    amat = ar + 1j * ai
    dm_np = amat @ amat.conj().T
    dm_np = dm_np / np.trace(dm_np).real
    dm_target = jnp.asarray(dm_np.astype(np.complex64))

    rho_gm, target_gm = autodiff_cha_alpha_forward(
        (s0r, s0i, s1r, s1i), dm_target, consts, dimA, dimB)
    jax.block_until_ready((rho_gm, target_gm))

    # ---- pure-numpy reference of the same math (complex128) ----
    s0 = np.asarray(s0r, np.float64) + 1j * np.asarray(s0i, np.float64)
    s1 = np.asarray(s1r, np.float64) + 1j * np.asarray(s1i, np.float64)
    s0 = s0 / np.linalg.norm(s0, axis=1, keepdims=True)
    s1 = s1 / np.linalg.norm(s1, axis=1, keepdims=True)
    psi = (s0[:, :, None] * s1[:, None, :]).reshape(num_state, d)
    rho = psi[:, :, None] * psi.conj()[:, None, :]
    ref_rho_gm = np.einsum('nij,kji->nk', rho, gm_np).real / 2.0
    ref_target_gm = np.einsum('ij,kji->k', dm_np, gm_np).real / 2.0

    assert np.allclose(np.asarray(rho_gm), ref_rho_gm, atol=1e-5, rtol=1e-4)
    assert np.allclose(np.asarray(target_gm), ref_target_gm, atol=1e-5, rtol=1e-4)

    print("KERNEL_OK")
</pallas_src>

<mosaic_0001>
module attributes {stable_mosaic.version = 11 : i64} {
  func.func @cha_gellmann_kernel(%arg0: i32, %arg1: memref<8x128xf32, #tpu.memory_space<vmem>>, %arg2: memref<16x8xf32, #tpu.memory_space<vmem>>, %arg3: memref<32x4xf32, #tpu.memory_space<vmem>>, %arg4: memref<16x16xf32, #tpu.memory_space<vmem>>, %arg5: memref<16x16xf32, #tpu.memory_space<vmem>>, %arg6: memref<16x128xf32, #tpu.memory_space<vmem>>) attributes {dimension_semantics = [#tpu.dimension_semantics<parallel>], iteration_bounds = array<i64: 1>, scalar_prefetch = 0 : i64, scratch_operands = 0 : i64, tpu.core_type = #tpu.core_type<tc>, window_params = [{transform_indices = @transform_0, window_bounds = array<i64: 8, 128>}, {pipeline_mode = #tpu.pipeline_mode<synchronous>, transform_indices = @transform_1, window_bounds = array<i64: 16, 8>}, {pipeline_mode = #tpu.pipeline_mode<synchronous>, transform_indices = @transform_2, window_bounds = array<i64: 32, 4>}, {pipeline_mode = #tpu.pipeline_mode<synchronous>, transform_indices = @transform_3, window_bounds = array<i64: 16, 16>}, {pipeline_mode = #tpu.pipeline_mode<synchronous>, transform_indices = @transform_4, window_bounds = array<i64: 16, 16>}, {transform_indices = @transform_5, window_bounds = array<i64: 16, 128>}]} {
    %c0 = arith.constant 0 : index
    %c0_0 = arith.constant 0 : index
    %0 = vector.load %arg1[%c0, %c0_0] : memref<8x128xf32, #tpu.memory_space<vmem>>, vector<8x128xf32>
    %1 = vector.extract_strided_slice %0 {offsets = [0, 0], sizes = [4, 128], strides = [1, 1]} : vector<8x128xf32> to vector<4x128xf32>
    %2 = vector.extract_strided_slice %0 {offsets = [0, 0], sizes = [4, 128], strides = [1, 1]} : vector<8x128xf32> to vector<4x128xf32>
    %3 = arith.mulf %1, %2 : vector<4x128xf32>
    %cst = arith.constant dense<0.000000e+00> : vector<128xf32>
    %4 = vector.multi_reduction <add>, %3, %cst [0] : vector<4x128xf32> to vector<128xf32>
    %5 = vector.shape_cast %4 : vector<128xf32> to vector<1x128xf32>
    %6 = vector.extract_strided_slice %0 {offsets = [4, 0], sizes = [4, 128], strides = [1, 1]} : vector<8x128xf32> to vector<4x128xf32>
    %7 = vector.extract_strided_slice %0 {offsets = [4, 0], sizes = [4, 128], strides = [1, 1]} : vector<8x128xf32> to vector<4x128xf32>
    %8 = arith.mulf %6, %7 : vector<4x128xf32>
    %cst_1 = arith.constant dense<0.000000e+00> : vector<128xf32>
    %9 = vector.multi_reduction <add>, %8, %cst_1 [0] : vector<4x128xf32> to vector<128xf32>
    %10 = vector.shape_cast %9 : vector<128xf32> to vector<1x128xf32>
    %11 = arith.mulf %5, %10 : vector<1x128xf32>
    %12 = math.rsqrt %11 : vector<1x128xf32>
    %c0_2 = arith.constant 0 : index
    %c0_3 = arith.constant 0 : index
    %13 = vector.load %arg2[%c0_2, %c0_3] : memref<16x8xf32, #tpu.memory_space<vmem>>, vector<16x8xf32>
    %cst_4 = arith.constant dense<0.000000e+00> : vector<16x128xf32>
    %14 = tpu.matmul %13, %0, %cst_4 {dimension_numbers = #tpu.dot_dimension_numbers<[1], [0], [0], [1], [0, 0, 1, 1], [], []>} : vector<16x8xf32>, vector<8x128xf32>, vector<16x128xf32> -> vector<16x128xf32>
    %15 = vector.extract_strided_slice %14 {offsets = [0, 0], sizes = [4, 128], strides = [1, 1]} : vector<16x128xf32> to vector<4x128xf32>
    %16 = vector.extract_strided_slice %14 {offsets = [4, 0], sizes = [4, 128], strides = [1, 1]} : vector<16x128xf32> to vector<4x128xf32>
    %17 = vector.extract_strided_slice %14 {offsets = [8, 0], sizes = [4, 128], strides = [1, 1]} : vector<16x128xf32> to vector<4x128xf32>
    %18 = vector.extract_strided_slice %14 {offsets = [12, 0], sizes = [4, 128], strides = [1, 1]} : vector<16x128xf32> to vector<4x128xf32>
    %19 = arith.mulf %15, %17 : vector<4x128xf32>
    %20 = arith.mulf %16, %18 : vector<4x128xf32>
    %21 = arith.subf %19, %20 : vector<4x128xf32>
    %22 = vector.broadcast %12 : vector<1x128xf32> to vector<4x128xf32>
    %23 = arith.mulf %21, %22 : vector<4x128xf32>
    %24 = arith.mulf %15, %18 : vector<4x128xf32>
    %25 = arith.mulf %16, %17 : vector<4x128xf32>
    %26 = arith.addf %24, %25 : vector<4x128xf32>
    %27 = vector.broadcast %12 : vector<1x128xf32> to vector<4x128xf32>
    %28 = arith.mulf %26, %27 : vector<4x128xf32>
    %c0_5 = arith.constant 0 : index
    %c0_6 = arith.constant 0 : index
    %29 = vector.load %arg3[%c0_5, %c0_6] : memref<32x4xf32, #tpu.memory_space<vmem>>, vector<32x4xf32>
    %cst_7 = arith.constant dense<0.000000e+00> : vector<32x128xf32>
    %30 = tpu.matmul %29, %23, %cst_7 {dimension_numbers = #tpu.dot_dimension_numbers<[1], [0], [0], [1], [0, 0, 1, 1], [], []>} : vector<32x4xf32>, vector<4x128xf32>, vector<32x128xf32> -> vector<32x128xf32>
    %c0_8 = arith.constant 0 : index
    %c0_9 = arith.constant 0 : index
    %31 = vector.load %arg3[%c0_8, %c0_9] : memref<32x4xf32, #tpu.memory_space<vmem>>, vector<32x4xf32>
    %cst_10 = arith.constant dense<0.000000e+00> : vector<32x128xf32>
    %32 = tpu.matmul %31, %28, %cst_10 {dimension_numbers = #tpu.dot_dimension_numbers<[1], [0], [0], [1], [0, 0, 1, 1], [], []>} : vector<32x4xf32>, vector<4x128xf32>, vector<32x128xf32> -> vector<32x128xf32>
    %33 = vector.extract_strided_slice %30 {offsets = [0, 0], sizes = [16, 128], strides = [1, 1]} : vector<32x128xf32> to vector<16x128xf32>
    %34 = vector.extract_strided_slice %30 {offsets = [16, 0], sizes = [16, 128], strides = [1, 1]} : vector<32x128xf32> to vector<16x128xf32>
    %35 = arith.mulf %33, %34 : vector<16x128xf32>
    %36 = vector.extract_strided_slice %32 {offsets = [0, 0], sizes = [16, 128], strides = [1, 1]} : vector<32x128xf32> to vector<16x128xf32>
    %37 = vector.extract_strided_slice %32 {offsets = [16, 0], sizes = [16, 128], strides = [1, 1]} : vector<32x128xf32> to vector<16x128xf32>
    %38 = arith.mulf %36, %37 : vector<16x128xf32>
    %39 = arith.addf %35, %38 : vector<16x128xf32>
    %40 = vector.extract_strided_slice %32 {offsets = [0, 0], sizes = [16, 128], strides = [1, 1]} : vector<32x128xf32> to vector<16x128xf32>
    %41 = vector.extract_strided_slice %30 {offsets = [16, 0], sizes = [16, 128], strides = [1, 1]} : vector<32x128xf32> to vector<16x128xf32>
    %42 = arith.mulf %40, %41 : vector<16x128xf32>
    %43 = vector.extract_strided_slice %30 {offsets = [0, 0], sizes = [16, 128], strides = [1, 1]} : vector<32x128xf32> to vector<16x128xf32>
    %44 = vector.extract_strided_slice %32 {offsets = [16, 0], sizes = [16, 128], strides = [1, 1]} : vector<32x128xf32> to vector<16x128xf32>
    %45 = arith.mulf %43, %44 : vector<16x128xf32>
    %46 = arith.subf %42, %45 : vector<16x128xf32>
    %c0_11 = arith.constant 0 : index
    %c0_12 = arith.constant 0 : index
    %47 = vector.load %arg4[%c0_11, %c0_12] : memref<16x16xf32, #tpu.memory_space<vmem>>, vector<16x16xf32>
    %cst_13 = arith.constant dense<0.000000e+00> : vector<16x128xf32>
    %48 = tpu.matmul %47, %39, %cst_13 {dimension_numbers = #tpu.dot_dimension_numbers<[1], [0], [0], [1], [0, 0, 1, 1], [], []>} : vector<16x16xf32>, vector<16x128xf32>, vector<16x128xf32> -> vector<16x128xf32>
    %c0_14 = arith.constant 0 : index
    %c0_15 = arith.constant 0 : index
    %49 = vector.load %arg5[%c0_14, %c0_15] : memref<16x16xf32, #tpu.memory_space<vmem>>, vector<16x16xf32>
    %cst_16 = arith.constant dense<0.000000e+00> : vector<16x128xf32>
    %50 = tpu.matmul %49, %46, %cst_16 {dimension_numbers = #tpu.dot_dimension_numbers<[1], [0], [0], [1], [0, 0, 1, 1], [], []>} : vector<16x16xf32>, vector<16x128xf32>, vector<16x128xf32> -> vector<16x128xf32>
    %51 = arith.addf %48, %50 : vector<16x128xf32>
    %c0_17 = arith.constant 0 : index
    %c0_18 = arith.constant 0 : index
    %52 = vector.load %arg6[%c0_17, %c0_18] : memref<16x128xf32, #tpu.memory_space<vmem>>, vector<16x128xf32>
    tpu.vector_store %arg6[%c0_17, %c0_18], %51 {strides = array<i32>} : memref<16x128xf32, #tpu.memory_space<vmem>>, vector<16x128xf32>,
    return
  }
  func.func @transform_0(%arg0: i32) -> (i32, i32) {
    %c0_i32 = arith.constant 0 : i32
    %c0_i32_0 = arith.constant 0 : i32
    return %c0_i32, %arg0 : i32, i32
  }
  func.func @transform_1(%arg0: i32) -> (i32, i32) {
    %c0_i32 = arith.constant 0 : i32
    %c0_i32_0 = arith.constant 0 : i32
    %c0_i32_1 = arith.constant 0 : i32
    return %c0_i32, %c0_i32_0 : i32, i32
  }
  func.func @transform_2(%arg0: i32) -> (i32, i32) {
    %c0_i32 = arith.constant 0 : i32
    %c0_i32_0 = arith.constant 0 : i32
    %c0_i32_1 = arith.constant 0 : i32
    return %c0_i32, %c0_i32_0 : i32, i32
  }
  func.func @transform_3(%arg0: i32) -> (i32, i32) {
    %c0_i32 = arith.constant 0 : i32
    %c0_i32_0 = arith.constant 0 : i32
    %c0_i32_1 = arith.constant 0 : i32
    return %c0_i32, %c0_i32_0 : i32, i32
  }
  func.func @transform_4(%arg0: i32) -> (i32, i32) {
    %c0_i32 = arith.constant 0 : i32
    %c0_i32_0 = arith.constant 0 : i32
    %c0_i32_1 = arith.constant 0 : i32
    return %c0_i32, %c0_i32_0 : i32, i32
  }
  func.func @transform_5(%arg0: i32) -> (i32, i32) {
    %c0_i32 = arith.constant 0 : i32
    %c0_i32_0 = arith.constant 0 : i32
    return %c0_i32, %arg0 : i32, i32
  }
}

</mosaic_0001>

<llo_original>
// kernel: tpu_custom_call.1
$region0: #{tpu_custom_call.1}
  #allocation0 [shape = 'u32[]', space=smem, size = 0x4, offset = 0x4, fixed_abs, tag = 'smem constant byte address 0x4 - core index']
  #allocation1 [shape = 'u32[144,128]{1,0:T(1,128)}', space=vmem, size = 0x12000, scoped, tag = 'internal scratch']
  %s0 = inlined_call_operand.vmem [shape: f32[8,128], index: 0, kind: input, shape index: {}]
  %s1 = inlined_call_operand.vmem [shape: f32[16,8], index: 1, kind: input, shape index: {}]
  %s2 = inlined_call_operand.vmem [shape: f32[32,4], index: 2, kind: input, shape index: {}]
  %s3 = inlined_call_operand.vmem [shape: f32[16,16], index: 3, kind: input, shape index: {}]
  %s4 = inlined_call_operand.vmem [shape: f32[16,16], index: 4, kind: input, shape index: {}]
  %s5 = inlined_call_operand.hbm [shape: f32[16,128], index: 5, kind: output, shape index: {}]
  %s6 = sld [smem:[#allocation0]]
  $region30: #{tpu_custom_call.1} parent=0
    _
  %s8 = ssub.s32 1, %s6
  %s9 = scalar_select 0, %s8, %s6
  $region1: #{tpu_custom_call.1} parent=0
    #allocation2 [shape = 'u8[8192]{0}', space=vmem, size = 0x2000, scoped, tag = 'output window, operand 0, single buffered']
    #allocation3 [shape = 's32[1]{0}', space=sflag, size = 0x4, scoped, tag = 'scoped memory for tpu_custom_call.1']
    %10 = vsyncpa [#allocation3], 0
    // Predicated region
    $region2: #{tpu_custom_call.1} parent=1 // pred_check
      _
    $region3: #{tpu_custom_call.1} parent=1 // pred_check_branch
      %12 = sbr.rel (0) target = $region5
    $region4: #{tpu_custom_call.1} parent=1 // pred_region
      _
    $region5: #{tpu_custom_call.1} parent=1 // pred_fallthru
      _
    // Predicated region
    $region6: #{tpu_custom_call.1} parent=1 // pred_check
      _
    $region7: #{tpu_custom_call.1} parent=1 // pred_check_branch
      %14 = sbr.rel (0) target = $region9
    $region8: #{tpu_custom_call.1} parent=1 // pred_region
      _
    $region9: #{tpu_custom_call.1} parent=1 // pred_fallthru
      _
    // Predicated region
    $region10: #{tpu_custom_call.1} parent=1 // pred_check
      _
    $region11: #{tpu_custom_call.1} parent=1 // pred_check_branch
      %16 = sbr.rel (0) target = $region13
    $region12: #{tpu_custom_call.1} parent=1 // pred_region
      _
    $region13: #{tpu_custom_call.1} parent=1 // pred_fallthru
      _
    // Predicated region
    $region14: #{tpu_custom_call.1} parent=1 // pred_check
      _
    $region15: #{tpu_custom_call.1} parent=1 // pred_check_branch
      %18 = sbr.rel (0) target = $region17
    $region16: #{tpu_custom_call.1} parent=1 // pred_region
      _
    $region17: #{tpu_custom_call.1} parent=1 // pred_fallthru
      _
    // Predicated region
    $region18: #{tpu_custom_call.1} parent=1 // pred_check
      _
    $region19: #{tpu_custom_call.1} parent=1 // pred_check_branch
      %20 = sbr.rel (0) target = $region21
    $region20: #{tpu_custom_call.1} parent=1 // pred_region
      _
    $region21: #{tpu_custom_call.1} parent=1 // pred_fallthru
      _
    %v21 = vld [vmem:[%s0] sm:$0xff]
    %v22 = vmul.f32 %v21, %v21
    %vm23 = vcmask 1043456
    %v24 = vsel %vm23, %v22, 0.0
    %v25 = vrot.slane %v24, 4
    %v26 = vadd.f32 %v24, %v25
    %v27 = vrot.slane %v26, 2
    %v28 = vadd.f32 %v26, %v27
    %v29 = vrot.slane %v28, 1
    %v30 = vadd.f32 %v28, %v29
    %v32 = vrot.slane %v22, 4
    %v34 = vsel %vm23, %v32, 0.0
    %v35 = vrot.slane %v34, 4
    %v36 = vadd.f32 %v34, %v35
    %v37 = vrot.slane %v36, 2
    %v38 = vadd.f32 %v36, %v37
    %v39 = vrot.slane %v38, 1
    %v40 = vadd.f32 %v38, %v39
    %v41 = vmul.f32 %v30, %v40
    %v42 = vrsqrt.pop %v41
    %v43 = vld [vmem:[%s1] sm:$0xff]
    %v44 = vld [vmem:[%s1 + $0x8] sm:$0xff]
    %vm45 = vcmask 64512
    %v47 = vsel %vm45, %v43, 0
    %v50 = vsel %vm45, %v44, 0
    %52 = vmatprep.subr.mxu0 0.0
    %53 = vmatpush1.msra.mxu0 %v21
    %54 = vmatprep.subr.mxu0 0.0
    %55 = vmatpush1.msra.mxu0 0.0
    %56 = vmatprep.subr.mxu0 0.0
    %57 = vmatpush1.msra.mxu0 0.0
    %58 = vmatprep.subr.mxu0 0.0
    %59 = vmatpush1.msra.mxu0 0.0
    %60 = vmatprep.subr.mxu0 0.0
    %61 = vmatpush1.msra.mxu0 0.0
    %62 = vmatprep.subr.mxu0 0.0
    %63 = vmatpush1.msra.mxu0 0.0
    %64 = vmatprep.subr.mxu0 0.0
    %65 = vmatpush1.msra.mxu0 0.0
    %66 = vmatprep.subr.mxu0 0.0
    %67 = vmatpush1.msra.mxu0 0.0
    %68 = vmatprep.subr.mxu0 0.0
    %69 = vmatpush1.msra.mxu0 0.0
    %70 = vmatprep.subr.mxu0 0.0
    %71 = vmatpush1.msra.mxu0 0.0
    %72 = vmatprep.subr.mxu0 0.0
    %73 = vmatpush1.msra.mxu0 0.0
    %74 = vmatprep.subr.mxu0 0.0
    %75 = vmatpush1.msra.mxu0 0.0
    %76 = vmatprep.subr.mxu0 0.0
    %77 = vmatpush1.msra.mxu0 0.0
    %78 = vmatprep.subr.mxu0 0.0
    %79 = vmatpush1.msra.mxu0 0.0
    %80 = vmatprep.subr.mxu0 0.0
    %81 = vmatpush1.msra.mxu0 0.0
    %82 = vmatprep.subr.mxu0 0.0
    %83 = vmatpush1.msra.mxu0 0.0
    %84 = vmatprep.subr.mxu0 0.0
    %85 = vmatpush1.msra.mxu0 0.0
    %86 = vmatprep.subr.mxu0 0.0
    %87 = vmatpush1.msra.mxu0 0.0
    %88 = vmatprep.subr.mxu0 0.0
    %89 = vmatpush1.msra.mxu0 0.0
    %90 = vmatprep.subr.mxu0 0.0
    %91 = vmatpush1.msra.mxu0 0.0
    %92 = vmatprep.subr.mxu0 0.0
    %93 = vmatpush1.msra.mxu0 0.0
    %94 = vmatprep.subr.mxu0 0.0
    %95 = vmatpush1.msra.mxu0 0.0
    %96 = vmatprep.subr.mxu0 0.0
    %97 = vmatpush1.msra.mxu0 0.0
    %98 = vmatprep.subr.mxu0 0.0
    %99 = vmatpush1.msra.mxu0 0.0
    %100 = vmatprep.subr.mxu0 0.0
    %101 = vmatpush1.msra.mxu0 0.0
    %102 = vmatprep.subr.mxu0 0.0
    %103 = vmatpush1.msra.mxu0 0.0
    %104 = vmatprep.subr.mxu0 0.0
    %105 = vmatpush1.msra.mxu0 0.0
    %106 = vmatprep.subr.mxu0 0.0
    %107 = vmatpush1.msra.mxu0 0.0
    %108 = vmatprep.subr.mxu0 0.0
    %109 = vmatpush1.msra.mxu0 0.0
    %110 = vmatprep.subr.mxu0 0.0
    %111 = vmatpush1.msra.mxu0 0.0
    %112 = vmatprep.subr.mxu0 0.0
    %113 = vmatpush1.msra.mxu0 0.0
    %114 = vmatprep.subr.mxu0 0.0
    %115 = vmatpush1.msra.mxu0 0.0
    %116 = vmatprep.mubr.f32.mxu0 0.0
    %117 = vmatmul.mubr.f32.gmra.mrb[0].mxu0 %v47
    %v118 = vpop.f32.mrb[0].mxu0
    %v119 = vadd.f32 0.0, %v118
    %v120 = vpop.f32.mrb[0].mxu0
    %121 = vmatprep.mubr.f32.mxu0 0.0
    %122 = vmatmul.mubr.f32.gmra.mrb[0].mxu0 %v50
    %v123 = vpop.f32.mrb[0].mxu0
    %v124 = vadd.f32 0.0, %v123
    %v125 = vpop.f32.mrb[0].mxu0
    %126 = vdwg.mxu0
    %v127 = vmul.f32 %v119, %v124
    %v129 = vrot.slane %v127, 4
    %v131 = vsub.f32 %v127, %v129
    %v132 = vmul.f32 %v131, %v42
    %v134 = vrot.slane %v124, 4
    %v136 = vmul.f32 %v119, %v134
    %v138 = vrot.slane %v136, 4
    %v140 = vadd.f32 %v136, %v138
    %v141 = vmul.f32 %v140, %v42
    %v142 = vld [vmem:[%s2] sm:$0xff]
    %v143 = vld [vmem:[%s2 + $0x8] sm:$0xff]
    %v144 = vld [vmem:[%s2 + $0x10] sm:$0xff]
    %v145 = vld [vmem:[%s2 + $0x18] sm:$0xff]
    %vm146 = vcmask 31744
    %v148 = vsel %vm146, %v142, 0
    %v151 = vsel %vm146, %v143, 0
    %v154 = vsel %vm146, %v144, 0
    %v157 = vsel %vm146, %v145, 0
    %v160 = vsel %vm23, %v132, 0
    %162 = vmatprep.subr.mxu0 0.0
    %163 = vmatpush1.msra.mxu0 %v160
    %164 = vmatprep.subr.mxu0 0.0
    %165 = vmatpush1.msra.mxu0 0.0
    %166 = vmatprep.subr.mxu0 0.0
    %167 = vmatpush1.msra.mxu0 0.0
    %168 = vmatprep.subr.mxu0 0.0
    %169 = vmatpush1.msra.mxu0 0.0
    %170 = vmatprep.subr.mxu0 0.0
    %171 = vmatpush1.msra.mxu0 0.0
    %172 = vmatprep.subr.mxu0 0.0
    %173 = vmatpush1.msra.mxu0 0.0
    %174 = vmatprep.subr.mxu0 0.0
    %175 = vmatpush1.msra.mxu0 0.0
    %176 = vmatprep.subr.mxu0 0.0
    %177 = vmatpush1.msra.mxu0 0.0
    %178 = vmatprep.subr.mxu0 0.0
    %179 = vmatpush1.msra.mxu0 0.0
    %180 = vmatprep.subr.mxu0 0.0
    %181 = vmatpush1.msra.mxu0 0.0
    %182 = vmatprep.subr.mxu0 0.0
    %183 = vmatpush1.msra.mxu0 0.0
    %184 = vmatprep.subr.mxu0 0.0
    %185 = vmatpush1.msra.mxu0 0.0
    %186 = vmatprep.subr.mxu0 0.0
    %187 = vmatpush1.msra.mxu0 0.0
    %188 = vmatprep.subr.mxu0 0.0
    %189 = vmatpush1.msra.mxu0 0.0
    %190 = vmatprep.subr.mxu0 0.0
    %191 = vmatpush1.msra.mxu0 0.0
    %192 = vmatprep.subr.mxu0 0.0
    %193 = vmatpush1.msra.mxu0 0.0
    %194 = vmatprep.subr.mxu0 0.0
    %195 = vmatpush1.msra.mxu0 0.0
    %196 = vmatprep.subr.mxu0 0.0
    %197 = vmatpush1.msra.mxu0 0.0
    %198 = vmatprep.subr.mxu0 0.0
    %199 = vmatpush1.msra.mxu0 0.0
    %200 = vmatprep.subr.mxu0 0.0
    %201 = vmatpush1.msra.mxu0 0.0
    %202 = vmatprep.subr.mxu0 0.0
    %203 = vmatpush1.msra.mxu0 0.0
    %204 = vmatprep.subr.mxu0 0.0
    %205 = vmatpush1.msra.mxu0 0.0
    %206 = vmatprep.subr.mxu0 0.0
    %207 = vmatpush1.msra.mxu0 0.0
    %208 = vmatprep.subr.mxu0 0.0
    %209 = vmatpush1.msra.mxu0 0.0
    %210 = vmatprep.subr.mxu0 0.0
    %211 = vmatpush1.msra.mxu0 0.0
    %212 = vmatprep.subr.mxu0 0.0
    %213 = vmatpush1.msra.mxu0 0.0
    %214 = vmatprep.subr.mxu0 0.0
    %215 = vmatpush1.msra.mxu0 0.0
    %216 = vmatprep.subr.mxu0 0.0
    %217 = vmatpush1.msra.mxu0 0.0
    %218 = vmatprep.subr.mxu0 0.0
    %219 = vmatpush1.msra.mxu0 0.0
    %220 = vmatprep.subr.mxu0 0.0
    %221 = vmatpush1.msra.mxu0 0.0
    %222 = vmatprep.subr.mxu0 0.0
    %223 = vmatpush1.msra.mxu0 0.0
    %224 = vmatprep.subr.mxu0 0.0
    %225 = vmatpush1.msra.mxu0 0.0
    %226 = vmatprep.mubr.f32.mxu0 0.0
    %227 = vmatmul.mubr.f32.gmra.mrb[0].mxu0 %v148
    %v228 = vpop.f32.mrb[0].mxu0
    %v229 = vadd.f32 0.0, %v228
    %v230 = vpop.f32.mrb[0].mxu0
    %231 = vmatprep.mubr.f32.mxu0 0.0
    %232 = vmatmul.mubr.f32.gmra.mrb[0].mxu0 %v151
    %v233 = vpop.f32.mrb[0].mxu0
    %v234 = vadd.f32 0.0, %v233
    %v235 = vpop.f32.mrb[0].mxu0
    %236 = vmatprep.mubr.f32.mxu0 0.0
    %237 = vmatmul.mubr.f32.gmra.mrb[0].mxu0 %v154
    %v238 = vpop.f32.mrb[0].mxu0
    %v239 = vadd.f32 0.0, %v238
    %v240 = vpop.f32.mrb[0].mxu0
    %241 = vmatprep.mubr.f32.mxu0 0.0
    %242 = vmatmul.mubr.f32.gmra.mrb[0].mxu0 %v157
    %v243 = vpop.f32.mrb[0].mxu0
    %v244 = vadd.f32 0.0, %v243
    %v245 = vpop.f32.mrb[0].mxu0
    %246 = vdwg.mxu0
    %v248 = vsel %vm23, %v141, 0
    %250 = vmatprep.subr.mxu0 0.0
    %251 = vmatpush1.msra.mxu0 %v248
    %252 = vmatprep.subr.mxu0 0.0
    %253 = vmatpush1.msra.mxu0 0.0
    %254 = vmatprep.subr.mxu0 0.0
    %255 = vmatpush1.msra.mxu0 0.0
    %256 = vmatprep.subr.mxu0 0.0
    %257 = vmatpush1.msra.mxu0 0.0
    %258 = vmatprep.subr.mxu0 0.0
    %259 = vmatpush1.msra.mxu0 0.0
    %260 = vmatprep.subr.mxu0 0.0
    %261 = vmatpush1.msra.mxu0 0.0
    %262 = vmatprep.subr.mxu0 0.0
    %263 = vmatpush1.msra.mxu0 0.0
    %264 = vmatprep.subr.mxu0 0.0
    %265 = vmatpush1.msra.mxu0 0.0
    %266 = vmatprep.subr.mxu0 0.0
    %267 = vmatpush1.msra.mxu0 0.0
    %268 = vmatprep.subr.mxu0 0.0
    %269 = vmatpush1.msra.mxu0 0.0
    %270 = vmatprep.subr.mxu0 0.0
    %271 = vmatpush1.msra.mxu0 0.0
    %272 = vmatprep.subr.mxu0 0.0
    %273 = vmatpush1.msra.mxu0 0.0
    %274 = vmatprep.subr.mxu0 0.0
    %275 = vmatpush1.msra.mxu0 0.0
    %276 = vmatprep.subr.mxu0 0.0
    %277 = vmatpush1.msra.mxu0 0.0
    %278 = vmatprep.subr.mxu0 0.0
    %279 = vmatpush1.msra.mxu0 0.0
    %280 = vmatprep.subr.mxu0 0.0
    %281 = vmatpush1.msra.mxu0 0.0
    %282 = vmatprep.subr.mxu0 0.0
    %283 = vmatpush1.msra.mxu0 0.0
    %284 = vmatprep.subr.mxu0 0.0
    %285 = vmatpush1.msra.mxu0 0.0
    %286 = vmatprep.subr.mxu0 0.0
    %287 = vmatpush1.msra.mxu0 0.0
    %288 = vmatprep.subr.mxu0 0.0
    %289 = vmatpush1.msra.mxu0 0.0
    %290 = vmatprep.subr.mxu0 0.0
    %291 = vmatpush1.msra.mxu0 0.0
    %292 = vmatprep.subr.mxu0 0.0
    %293 = vmatpush1.msra.mxu0 0.0
    %294 = vmatprep.subr.mxu0 0.0
    %295 = vmatpush1.msra.mxu0 0.0
    %296 = vmatprep.subr.mxu0 0.0
    %297 = vmatpush1.msra.mxu0 0.0
    %298 = vmatprep.subr.mxu0 0.0
    %299 = vmatpush1.msra.mxu0 0.0
    %300 = vmatprep.subr.mxu0 0.0
    %301 = vmatpush1.msra.mxu0 0.0
    %302 = vmatprep.subr.mxu0 0.0
    %303 = vmatpush1.msra.mxu0 0.0
    %304 = vmatprep.subr.mxu0 0.0
    %305 = vmatpush1.msra.mxu0 0.0
    %306 = vmatprep.subr.mxu0 0.0
    %307 = vmatpush1.msra.mxu0 0.0
    %308 = vmatprep.subr.mxu0 0.0
    %309 = vmatpush1.msra.mxu0 0.0
    %310 = vmatprep.subr.mxu0 0.0
    %311 = vmatpush1.msra.mxu0 0.0
    %312 = vmatprep.subr.mxu0 0.0
    %313 = vmatpush1.msra.mxu0 0.0
    %314 = vmatprep.mubr.f32.mxu0 0.0
    %315 = vmatmul.mubr.f32.gmra.mrb[0].mxu0 %v148
    %v316 = vpop.f32.mrb[0].mxu0
    %v317 = vadd.f32 0.0, %v316
    %v318 = vpop.f32.mrb[0].mxu0
    %319 = vmatprep.mubr.f32.mxu0 0.0
    %320 = vmatmul.mubr.f32.gmra.mrb[0].mxu0 %v151
    %v321 = vpop.f32.mrb[0].mxu0
    %v322 = vadd.f32 0.0, %v321
    %v323 = vpop.f32.mrb[0].mxu0
    %324 = vmatprep.mubr.f32.mxu0 0.0
    %325 = vmatmul.mubr.f32.gmra.mrb[0].mxu0 %v154
    %v326 = vpop.f32.mrb[0].mxu0
    %v327 = vadd.f32 0.0, %v326
    %v328 = vpop.f32.mrb[0].mxu0
    %329 = vmatprep.mubr.f32.mxu0 0.0
    %330 = vmatmul.mubr.f32.gmra.mrb[0].mxu0 %v157
    %v331 = vpop.f32.mrb[0].mxu0
    %v332 = vadd.f32 0.0, %v331
    %v333 = vpop.f32.mrb[0].mxu0
    %334 = vdwg.mxu0
    %v335 = vmul.f32 %v229, %v239
    %v336 = vmul.f32 %v234, %v244
    %v337 = vmul.f32 %v317, %v327
    %v338 = vmul.f32 %v322, %v332
    %v339 = vadd.f32 %v335, %v337
    %v340 = vadd.f32 %v336, %v338
    %v341 = vmul.f32 %v317, %v239
    %v342 = vmul.f32 %v322, %v244
    %v343 = vmul.f32 %v229, %v327
    %v344 = vmul.f32 %v234, %v332
    %v345 = vsub.f32 %v341, %v343
    %v346 = vsub.f32 %v342, %v344
    %v347 = vld [vmem:[%s3] sm:$0xff]
    %v348 = vld [vmem:[%s3 + $0x8] sm:$0xff]
    %v349 = vld [vmem:[%s4] sm:$0xff]
    %v350 = vld [vmem:[%s4 + $0x8] sm:$0xff]
    %vm351 = vcmask 130048
    %v353 = vsel %vm351, %v349, 0
    %v356 = vsel %vm351, %v350, 0
    %358 = vmatprep.subr.mxu0 0.0
    %359 = vmatpush1.msra.mxu0 %v345
    %360 = vmatprep.subr.mxu0 0.0
    %361 = vmatpush1.msra.mxu0 %v346
    %362 = vmatprep.subr.mxu0 0.0
    %363 = vmatpush1.msra.mxu0 0.0
    %364 = vmatprep.subr.mxu0 0.0
    %365 = vmatpush1.msra.mxu0 0.0
    %366 = vmatprep.subr.mxu0 0.0
    %367 = vmatpush1.msra.mxu0 0.0
    %368 = vmatprep.subr.mxu0 0.0
    %369 = vmatpush1.msra.mxu0 0.0
    %370 = vmatprep.subr.mxu0 0.0
    %371 = vmatpush1.msra.mxu0 0.0
    %372 = vmatprep.subr.mxu0 0.0
    %373 = vmatpush1.msra.mxu0 0.0
    %374 = vmatprep.subr.mxu0 0.0
    %375 = vmatpush1.msra.mxu0 0.0
    %376 = vmatprep.subr.mxu0 0.0
    %377 = vmatpush1.msra.mxu0 0.0
    %378 = vmatprep.subr.mxu0 0.0
    %379 = vmatpush1.msra.mxu0 0.0
    %380 = vmatprep.subr.mxu0 0.0
    %381 = vmatpush1.msra.mxu0 0.0
    %382 = vmatprep.subr.mxu0 0.0
    %383 = vmatpush1.msra.mxu0 0.0
    %384 = vmatprep.subr.mxu0 0.0
    %385 = vmatpush1.msra.mxu0 0.0
    %386 = vmatprep.subr.mxu0 0.0
    %387 = vmatpush1.msra.mxu0 0.0
    %388 = vmatprep.subr.mxu0 0.0
    %389 = vmatpush1.msra.mxu0 0.0
    %390 = vmatprep.subr.mxu0 0.0
    %391 = vmatpush1.msra.mxu0 0.0
    %392 = vmatprep.subr.mxu0 0.0
    %393 = vmatpush1.msra.mxu0 0.0
    %394 = vmatprep.subr.mxu0 0.0
    %395 = vmatpush1.msra.mxu0 0.0
    %396 = vmatprep.subr.mxu0 0.0
    %397 = vmatpush1.msra.mxu0 0.0
    %398 = vmatprep.subr.mxu0 0.0
    %399 = vmatpush1.msra.mxu0 0.0
    %400 = vmatprep.subr.mxu0 0.0
    %401 = vmatpush1.msra.mxu0 0.0
    %402 = vmatprep.subr.mxu0 0.0
    %403 = vmatpush1.msra.mxu0 0.0
    %404 = vmatprep.subr.mxu0 0.0
    %405 = vmatpush1.msra.mxu0 0.0
    %406 = vmatprep.subr.mxu0 0.0
    %407 = vmatpush1.msra.mxu0 0.0
    %408 = vmatprep.subr.mxu0 0.0
    %409 = vmatpush1.msra.mxu0 0.0
    %410 = vmatprep.subr.mxu0 0.0
    %411 = vmatpush1.msra.mxu0 0.0
    %412 = vmatprep.subr.mxu0 0.0
    %413 = vmatpush1.msra.mxu0 0.0
    %414 = vmatprep.subr.mxu0 0.0
    %415 = vmatpush1.msra.mxu0 0.0
    %416 = vmatprep.subr.mxu0 0.0
    %417 = vmatpush1.msra.mxu0 0.0
    %418 = vmatprep.subr.mxu0 0.0
    %419 = vmatpush1.msra.mxu0 0.0
    %420 = vmatprep.subr.mxu0 0.0
    %421 = vmatpush1.msra.mxu0 0.0
    %422 = vmatprep.mubr.f32.mxu0 0.0
    %423 = vmatmul.mubr.f32.gmra.mrb[0].mxu0 %v353
    %v424 = vpop.f32.mrb[0].mxu0
    %v425 = vadd.f32 0.0, %v424
    %v426 = vpop.f32.mrb[0].mxu0
    %427 = vmatprep.mubr.f32.mxu0 0.0
    %428 = vmatmul.mubr.f32.gmra.mrb[0].mxu0 %v356
    %v429 = vpop.f32.mrb[0].mxu0
    %v430 = vadd.f32 0.0, %v429
    %v431 = vpop.f32.mrb[0].mxu0
    %432 = vdwg.mxu0
    %v434 = vsel %vm351, %v347, 0
    %v437 = vsel %vm351, %v348, 0
    %439 = vmatprep.subr.mxu0 0.0
    %440 = vmatpush1.msra.mxu0 %v339
    %441 = vmatprep.subr.mxu0 0.0
    %442 = vmatpush1.msra.mxu0 %v340
    %443 = vmatprep.subr.mxu0 0.0
    %444 = vmatpush1.msra.mxu0 0.0
    %445 = vmatprep.subr.mxu0 0.0
    %446 = vmatpush1.msra.mxu0 0.0
    %447 = vmatprep.subr.mxu0 0.0
    %448 = vmatpush1.msra.mxu0 0.0
    %449 = vmatprep.subr.mxu0 0.0
    %450 = vmatpush1.msra.mxu0 0.0
    %451 = vmatprep.subr.mxu0 0.0
    %452 = vmatpush1.msra.mxu0 0.0
    %453 = vmatprep.subr.mxu0 0.0
    %454 = vmatpush1.msra.mxu0 0.0
    %455 = vmatprep.subr.mxu0 0.0
    %456 = vmatpush1.msra.mxu0 0.0
    %457 = vmatprep.subr.mxu0 0.0
    %458 = vmatpush1.msra.mxu0 0.0
    %459 = vmatprep.subr.mxu0 0.0
    %460 = vmatpush1.msra.mxu0 0.0
    %461 = vmatprep.subr.mxu0 0.0
    %462 = vmatpush1.msra.mxu0 0.0
    %463 = vmatprep.subr.mxu0 0.0
    %464 = vmatpush1.msra.mxu0 0.0
    %465 = vmatprep.subr.mxu0 0.0
    %466 = vmatpush1.msra.mxu0 0.0
    %467 = vmatprep.subr.mxu0 0.0
    %468 = vmatpush1.msra.mxu0 0.0
    %469 = vmatprep.subr.mxu0 0.0
    %470 = vmatpush1.msra.mxu0 0.0
    %471 = vmatprep.subr.mxu0 0.0
    %472 = vmatpush1.msra.mxu0 0.0
    %473 = vmatprep.subr.mxu0 0.0
    %474 = vmatpush1.msra.mxu0 0.0
    %475 = vmatprep.subr.mxu0 0.0
    %476 = vmatpush1.msra.mxu0 0.0
    %477 = vmatprep.subr.mxu0 0.0
    %478 = vmatpush1.msra.mxu0 0.0
    %479 = vmatprep.subr.mxu0 0.0
    %480 = vmatpush1.msra.mxu0 0.0
    %481 = vmatprep.subr.mxu0 0.0
    %482 = vmatpush1.msra.mxu0 0.0
    %483 = vmatprep.subr.mxu0 0.0
    %484 = vmatpush1.msra.mxu0 0.0
    %485 = vmatprep.subr.mxu0 0.0
    %486 = vmatpush1.msra.mxu0 0.0
    %487 = vmatprep.subr.mxu0 0.0
    %488 = vmatpush1.msra.mxu0 0.0
    %489 = vmatprep.subr.mxu0 0.0
    %490 = vmatpush1.msra.mxu0 0.0
    %491 = vmatprep.subr.mxu0 0.0
    %492 = vmatpush1.msra.mxu0 0.0
    %493 = vmatprep.subr.mxu0 0.0
    %494 = vmatpush1.msra.mxu0 0.0
    %495 = vmatprep.subr.mxu0 0.0
    %496 = vmatpush1.msra.mxu0 0.0
    %497 = vmatprep.subr.mxu0 0.0
    %498 = vmatpush1.msra.mxu0 0.0
    %499 = vmatprep.subr.mxu0 0.0
    %500 = vmatpush1.msra.mxu0 0.0
    %501 = vmatprep.subr.mxu0 0.0
    %502 = vmatpush1.msra.mxu0 0.0
    %503 = vmatprep.mubr.f32.mxu0 0.0
    %504 = vmatmul.mubr.f32.gmra.mrb[0].mxu0 %v434
    %v505 = vpop.f32.mrb[0].mxu0
    %v506 = vadd.f32 %v425, %v505
    %v507 = vpop.f32.mrb[0].mxu0
    %508 = vmatprep.mubr.f32.mxu0 0.0
    %509 = vmatmul.mubr.f32.gmra.mrb[0].mxu0 %v437
    %v510 = vpop.f32.mrb[0].mxu0
    %v511 = vadd.f32 %v430, %v510
    %v512 = vpop.f32.mrb[0].mxu0
    %513 = vdwg.mxu0
    %514 = vst [vmem:[#allocation2] sm:$0xff] %v506
    %515 = vst [vmem:[#allocation2 + $0x8] sm:$0xff] %v511
    // Predicated region
    $region22: #{tpu_custom_call.1} parent=1 // pred_check
      _
    $region23: #{tpu_custom_call.1} parent=1 // pred_check_branch
      %517 = sbr.rel (0) target = $region25
    $region24: #{tpu_custom_call.1} parent=1 // pred_region
      %s519 = ssub.s32 256, 256
      %520 = vsyncadd [#allocation3], %s519
      %s521 = sshll.u32 [#allocation2], 4
      %s522 = int_to_ptr.vmem [resolvable:$true] %s521
      %527 = dma.vmem_to_hbm [thread:$0]  %s522, 256, %s5, [#allocation3], 128, 128, 8
    $region25: #{tpu_custom_call.1} parent=1 // pred_fallthru
      _
    // Predicated region
    $region26: #{tpu_custom_call.1} parent=1 // pred_check
      _
    $region27: #{tpu_custom_call.1} parent=1 // pred_check_branch
      %529 = sbr.rel (0) target = $region29
    $region28: #{tpu_custom_call.1} parent=1 // pred_region
      %530 = dma.done [#allocation3], 256
    $region29: #{tpu_custom_call.1} parent=1 // pred_fallthru
      _
    %531 = vsyncpa [#allocation3], 1

</llo_original>
